<compile_context>
chip_gen: v7x
topology: tpu7x:2x2x1
jax: 0.10.0
libtpu: 0.0.40
codegen_flags: <defaults>
</compile_context>

<pallas_src>
import functools

import jax
import jax.numpy as jnp
from jax import lax
from jax.experimental import pallas as pl
from jax.experimental.pallas import tpu as pltpu


def _conv_bn_silu_kernel(x_ref, w_ref, b_ref, o_ref, *scratch,
                         K, stride, Ho, Wph, Cin):
    """One batch element: im2col into VMEM scratch -> single MXU matmul -> bias -> SiLU.

    x_ref : (1, s, s, Cin, Hph*Wph)  space-to-depth phase planes, flattened spatial
    w_ref : (Cout, K*K*Cin)          BN-scale-folded weights, row order (ky, kx, c)
    b_ref : (Cout, 1)                folded BN bias
    o_ref : (1, Cout, Ho*Wph)        flattened output (width margin cropped in wrapper)
    scratch (only if K > 1):
      p_ref : (K*K*Cin, Ho*Wph)      VMEM scratch holding the im2col matrix
    """
    s = stride
    L = Ho * Wph

    if K == 1:
        # 1x1 conv: the single tap is already the matmul RHS; no scratch needed.
        patches = x_ref[0, 0, 0, :, 0:L]
    else:
        p_ref = scratch[0]
        # Every conv tap (ky, kx) is a contiguous, lane-dense slice of one phase plane.
        for ky in range(K):
            for kx in range(K):
                row0 = (ky * K + kx) * Cin
                start = (ky // s) * Wph + (kx // s)
                p_ref[row0:row0 + Cin, :] = x_ref[0, ky % s, kx % s, :,
                                                  start:start + L]
        patches = p_ref[...]

    # Single contraction over K*K*Cin on the MXU, f32 accumulation.
    y = jnp.dot(w_ref[...], patches, preferred_element_type=jnp.float32)
    y = y + b_ref[...]                                        # folded BatchNorm bias
    o_ref[0] = (y * jax.nn.sigmoid(y)).astype(o_ref.dtype)    # SiLU


@functools.partial(jax.jit, static_argnames=("kernel_size", "stride", "compute_dtype"))
def conv_kxbn_relu(x_nchw, w_oihw, gamma, beta, running_mean, running_var,
                   *, kernel_size, stride, eps=1e-5, compute_dtype=None):
    """Matches ConvKXBNRELU.forward (eval-mode BN, SiLU). Input/output NCHW.

    compute_dtype: set to jnp.bfloat16 on v6e/v7x to halve DMA/VMEM bytes and use the
    full bf16 MXU rate (accumulation stays f32); default None keeps f32 operands.
    """
    N, Cin, H, W = x_nchw.shape
    Cout = w_oihw.shape[0]
    K, s = kernel_size, stride
    pad = (K - 1) // 2
    Hp, Wp = H + 2 * pad, W + 2 * pad
    Ho = (Hp - K) // s + 1
    Wo = (Wp - K) // s + 1
    q = (K - 1) // s                       # max phase-plane offset of any tap
    # Phase-plane extents. The +1 guard row (only when q > 0) covers the flattened
    # window overrun of the last tap: start_max + Ho*Wph <= Hph*Wph.
    Hph = max(Ho + q, -(-Hp // s)) + (1 if q > 0 else 0)
    Wph = max(Wo + q, -(-Wp // s))
    L = Ho * Wph
    KKC = K * K * Cin

    # ---- BatchNorm folding: scale goes into the weights, only bias stays in-kernel.
    inv_std = 1.0 / jnp.sqrt(running_var.astype(jnp.float32) + eps)
    scale = gamma.astype(jnp.float32) * inv_std                          # (Cout,)
    bias = beta.astype(jnp.float32) - running_mean.astype(jnp.float32) * scale
    w_f = w_oihw.astype(jnp.float32) * scale[:, None, None, None]        # (Cout,Cin,K,K)
    w_mat = jnp.transpose(w_f, (0, 2, 3, 1)).reshape(Cout, KKC)          # rows: (ky,kx,c)
    b_mat = bias.reshape(Cout, 1)

    # ---- Zero-pad + space-to-depth: stride phases become small leading dims so the
    #      kernel only ever takes contiguous slices of a flattened (Cin, Hph*Wph) plane.
    #      For stride=1 (and 1x1 convs) this is a pure reshape — no extra HBM pass.
    # TODO(synk): padding + phase split is one wrapper HBM pass over x for stride>1;
    #             could be folded into the kernel DMA with element-offset BlockSpecs
    #             if it ever dominates.
    x_pad = jnp.pad(x_nchw, ((0, 0), (0, 0),
                             (pad, s * Hph - H - pad),
                             (pad, s * Wph - W - pad)))
    x_s2d = x_pad.reshape(N, Cin, Hph, s, Wph, s).transpose(0, 3, 5, 1, 2, 4)
    x_s2d = x_s2d.reshape(N, s, s, Cin, Hph * Wph)

    if compute_dtype is not None:
        x_s2d = x_s2d.astype(compute_dtype)
        w_mat = w_mat.astype(compute_dtype)
    cdt = x_s2d.dtype

    kernel = functools.partial(_conv_bn_silu_kernel,
                               K=K, stride=s, Ho=Ho, Wph=Wph, Cin=Cin)

    scratch_shapes = [] if K == 1 else [pltpu.VMEM((KKC, L), cdt)]

    out_flat = pl.pallas_call(
        kernel,
        out_shape=jax.ShapeDtypeStruct((N, Cout, L), jnp.float32),
        grid_spec=pltpu.PrefetchScalarGridSpec(
            num_scalar_prefetch=0,
            grid=(N,),
            in_specs=[
                pl.BlockSpec((1, s, s, Cin, Hph * Wph), lambda n: (n, 0, 0, 0, 0)),
                pl.BlockSpec((Cout, KKC), lambda n: (0, 0)),
                pl.BlockSpec((Cout, 1), lambda n: (0, 0)),
            ],
            out_specs=pl.BlockSpec((1, Cout, L), lambda n: (n, 0, 0)),
            scratch_shapes=scratch_shapes,
        ),
        compiler_params=pltpu.CompilerParams(dimension_semantics=("parallel",)),
    )(x_s2d, w_mat, b_mat)

    # Flattened output columns are (oh, padded width); crop the small width margin.
    out = out_flat.reshape(N, Cout, Ho, Wph)[:, :, :, :Wo]
    return out


def _reference(x_nchw, w_oihw, gamma, beta, running_mean, running_var,
               *, kernel_size, stride, eps=1e-5):
    pad = (kernel_size - 1) // 2
    conv = lax.conv_general_dilated(
        x_nchw.astype(jnp.float32), w_oihw.astype(jnp.float32),
        window_strides=(stride, stride),
        padding=[(pad, pad), (pad, pad)],
        dimension_numbers=("NCHW", "OIHW", "NCHW"))
    scale = gamma / jnp.sqrt(running_var + eps)
    bias = beta - running_mean * scale
    y = conv * scale[None, :, None, None] + bias[None, :, None, None]
    return y * jax.nn.sigmoid(y)


def _check(x, w, gamma, beta, mean, var, *, K, S):
    out = conv_kxbn_relu(x, w, gamma, beta, mean, var, kernel_size=K, stride=S)
    out = jax.block_until_ready(out)
    ref = _reference(x, w, gamma, beta, mean, var, kernel_size=K, stride=S)
    assert out.shape == ref.shape, (out.shape, ref.shape)
    err = float(jnp.max(jnp.abs(out - ref)))
    assert jnp.allclose(out, ref, atol=1e-4, rtol=1e-4), err


if __name__ == "__main__":
    # Shapes consistent with the module: small stem-style config.
    N, Cin, H, W = 2, 4, 16, 16
    Cout = 8

    key = jax.random.PRNGKey(0)
    k_x, k_w, k_g, k_b, k_m, k_v = jax.random.split(key, 6)

    x = jax.random.normal(k_x, (N, Cin, H, W), jnp.float32)
    gamma = 1.0 + 0.1 * jax.random.normal(k_g, (Cout,), jnp.float32)
    beta = 0.1 * jax.random.normal(k_b, (Cout,), jnp.float32)
    running_mean = 0.1 * jax.random.normal(k_m, (Cout,), jnp.float32)
    running_var = jnp.abs(jax.random.normal(k_v, (Cout,), jnp.float32)) + 0.5

    # 3x3 stride-2 (typical TinyNAS stem).
    w3 = jax.random.normal(k_w, (Cout, Cin, 3, 3), jnp.float32) * 0.1
    _check(x, w3, gamma, beta, running_mean, running_var, K=3, S=2)

    # 3x3 stride-1.
    _check(x, w3, gamma, beta, running_mean, running_var, K=3, S=1)

    # 1x1 stride-1 (fast path: no im2col scratch).
    w1 = jax.random.normal(k_w, (Cout, Cin, 1, 1), jnp.float32) * 0.1
    _check(x, w1, gamma, beta, running_mean, running_var, K=1, S=1)

    print("KERNEL_OK")
</pallas_src>

<mosaic_0001>
module attributes {stable_mosaic.version = 11 : i64} {
  func.func @_conv_bn_silu_kernel(%arg0: i32, %arg1: memref<1x2x2x4x90xf32, #tpu.memory_space<vmem>>, %arg2: memref<8x36xf32, #tpu.memory_space<vmem>>, %arg3: memref<8x1xf32, #tpu.memory_space<vmem>>, %arg4: memref<1x8x72xf32, #tpu.memory_space<vmem>>, %arg5: memref<36x72xf32, #tpu.memory_space<vmem>>) attributes {dimension_semantics = [#tpu.dimension_semantics<parallel>], iteration_bounds = array<i64: 2>, scalar_prefetch = 0 : i64, scratch_operands = 1 : i64, tpu.core_type = #tpu.core_type<tc>, window_params = [{transform_indices = @transform_0, window_bounds = array<i64: 1, 2, 2, 4, 90>}, {pipeline_mode = #tpu.pipeline_mode<synchronous>, transform_indices = @transform_1, window_bounds = array<i64: 8, 36>}, {pipeline_mode = #tpu.pipeline_mode<synchronous>, transform_indices = @transform_2, window_bounds = array<i64: 8, 1>}, {transform_indices = @transform_3, window_bounds = array<i64: 1, 8, 72>}]} {
    %c0 = arith.constant 0 : index
    %c0_0 = arith.constant 0 : index
    %c0_1 = arith.constant 0 : index
    %c0_2 = arith.constant 0 : index
    %c0_3 = arith.constant 0 : index
    %0 = vector.load %arg1[%c0, %c0_0, %c0_1, %c0_2, %c0_3] : memref<1x2x2x4x90xf32, #tpu.memory_space<vmem>>, vector<1x1x1x4x72xf32>
    %1 = vector.shape_cast %0 : vector<1x1x1x4x72xf32> to vector<4x72xf32>
    %c0_4 = arith.constant 0 : index
    %c0_5 = arith.constant 0 : index
    %2 = vector.load %arg5[%c0_4, %c0_5] : memref<36x72xf32, #tpu.memory_space<vmem>>, vector<4x72xf32>
    tpu.vector_store %arg5[%c0_4, %c0_5], %1 {strides = array<i32>} : memref<36x72xf32, #tpu.memory_space<vmem>>, vector<4x72xf32>,
    %c0_6 = arith.constant 0 : index
    %c0_7 = arith.constant 0 : index
    %c1 = arith.constant 1 : index
    %c0_8 = arith.constant 0 : index
    %c0_9 = arith.constant 0 : index
    %3 = vector.load %arg1[%c0_6, %c0_7, %c1, %c0_8, %c0_9] : memref<1x2x2x4x90xf32, #tpu.memory_space<vmem>>, vector<1x1x1x4x72xf32>
    %4 = vector.shape_cast %3 : vector<1x1x1x4x72xf32> to vector<4x72xf32>
    %c4 = arith.constant 4 : index
    %c0_10 = arith.constant 0 : index
    %5 = vector.load %arg5[%c4, %c0_10] : memref<36x72xf32, #tpu.memory_space<vmem>>, vector<4x72xf32>
    tpu.vector_store %arg5[%c4, %c0_10], %4 {strides = array<i32>} : memref<36x72xf32, #tpu.memory_space<vmem>>, vector<4x72xf32>,
    %c0_11 = arith.constant 0 : index
    %c0_12 = arith.constant 0 : index
    %c0_13 = arith.constant 0 : index
    %c0_14 = arith.constant 0 : index
    %c1_15 = arith.constant 1 : index
    %6 = vector.load %arg1[%c0_11, %c0_12, %c0_13, %c0_14, %c1_15] : memref<1x2x2x4x90xf32, #tpu.memory_space<vmem>>, vector<1x1x1x4x72xf32>
    %7 = vector.shape_cast %6 : vector<1x1x1x4x72xf32> to vector<4x72xf32>
    %c8 = arith.constant 8 : index
    %c0_16 = arith.constant 0 : index
    %8 = vector.load %arg5[%c8, %c0_16] : memref<36x72xf32, #tpu.memory_space<vmem>>, vector<4x72xf32>
    tpu.vector_store %arg5[%c8, %c0_16], %7 {strides = array<i32>} : memref<36x72xf32, #tpu.memory_space<vmem>>, vector<4x72xf32>,
    %c0_17 = arith.constant 0 : index
    %c1_18 = arith.constant 1 : index
    %c0_19 = arith.constant 0 : index
    %c0_20 = arith.constant 0 : index
    %c0_21 = arith.constant 0 : index
    %9 = vector.load %arg1[%c0_17, %c1_18, %c0_19, %c0_20, %c0_21] : memref<1x2x2x4x90xf32, #tpu.memory_space<vmem>>, vector<1x1x1x4x72xf32>
    %10 = vector.shape_cast %9 : vector<1x1x1x4x72xf32> to vector<4x72xf32>
    %c12 = arith.constant 12 : index
    %c0_22 = arith.constant 0 : index
    %11 = vector.load %arg5[%c12, %c0_22] : memref<36x72xf32, #tpu.memory_space<vmem>>, vector<4x72xf32>
    tpu.vector_store %arg5[%c12, %c0_22], %10 {strides = array<i32>} : memref<36x72xf32, #tpu.memory_space<vmem>>, vector<4x72xf32>,
    %c0_23 = arith.constant 0 : index
    %c1_24 = arith.constant 1 : index
    %c1_25 = arith.constant 1 : index
    %c0_26 = arith.constant 0 : index
    %c0_27 = arith.constant 0 : index
    %12 = vector.load %arg1[%c0_23, %c1_24, %c1_25, %c0_26, %c0_27] : memref<1x2x2x4x90xf32, #tpu.memory_space<vmem>>, vector<1x1x1x4x72xf32>
    %13 = vector.shape_cast %12 : vector<1x1x1x4x72xf32> to vector<4x72xf32>
    %c16 = arith.constant 16 : index
    %c0_28 = arith.constant 0 : index
    %14 = vector.load %arg5[%c16, %c0_28] : memref<36x72xf32, #tpu.memory_space<vmem>>, vector<4x72xf32>
    tpu.vector_store %arg5[%c16, %c0_28], %13 {strides = array<i32>} : memref<36x72xf32, #tpu.memory_space<vmem>>, vector<4x72xf32>,
    %c0_29 = arith.constant 0 : index
    %c1_30 = arith.constant 1 : index
    %c0_31 = arith.constant 0 : index
    %c0_32 = arith.constant 0 : index
    %c1_33 = arith.constant 1 : index
    %15 = vector.load %arg1[%c0_29, %c1_30, %c0_31, %c0_32, %c1_33] : memref<1x2x2x4x90xf32, #tpu.memory_space<vmem>>, vector<1x1x1x4x72xf32>
    %16 = vector.shape_cast %15 : vector<1x1x1x4x72xf32> to vector<4x72xf32>
    %c20 = arith.constant 20 : index
    %c0_34 = arith.constant 0 : index
    %17 = vector.load %arg5[%c20, %c0_34] : memref<36x72xf32, #tpu.memory_space<vmem>>, vector<4x72xf32>
    tpu.vector_store %arg5[%c20, %c0_34], %16 {strides = array<i32>} : memref<36x72xf32, #tpu.memory_space<vmem>>, vector<4x72xf32>,
    %c0_35 = arith.constant 0 : index
    %c0_36 = arith.constant 0 : index
    %c0_37 = arith.constant 0 : index
    %c0_38 = arith.constant 0 : index
    %c9 = arith.constant 9 : index
    %18 = vector.load %arg1[%c0_35, %c0_36, %c0_37, %c0_38, %c9] : memref<1x2x2x4x90xf32, #tpu.memory_space<vmem>>, vector<1x1x1x4x72xf32>
    %19 = vector.shape_cast %18 : vector<1x1x1x4x72xf32> to vector<4x72xf32>
    %c24 = arith.constant 24 : index
    %c0_39 = arith.constant 0 : index
    %20 = vector.load %arg5[%c24, %c0_39] : memref<36x72xf32, #tpu.memory_space<vmem>>, vector<4x72xf32>
    tpu.vector_store %arg5[%c24, %c0_39], %19 {strides = array<i32>} : memref<36x72xf32, #tpu.memory_space<vmem>>, vector<4x72xf32>,
    %c0_40 = arith.constant 0 : index
    %c0_41 = arith.constant 0 : index
    %c1_42 = arith.constant 1 : index
    %c0_43 = arith.constant 0 : index
    %c9_44 = arith.constant 9 : index
    %21 = vector.load %arg1[%c0_40, %c0_41, %c1_42, %c0_43, %c9_44] : memref<1x2x2x4x90xf32, #tpu.memory_space<vmem>>, vector<1x1x1x4x72xf32>
    %22 = vector.shape_cast %21 : vector<1x1x1x4x72xf32> to vector<4x72xf32>
    %c28 = arith.constant 28 : index
    %c0_45 = arith.constant 0 : index
    %23 = vector.load %arg5[%c28, %c0_45] : memref<36x72xf32, #tpu.memory_space<vmem>>, vector<4x72xf32>
    tpu.vector_store %arg5[%c28, %c0_45], %22 {strides = array<i32>} : memref<36x72xf32, #tpu.memory_space<vmem>>, vector<4x72xf32>,
    %c0_46 = arith.constant 0 : index
    %c0_47 = arith.constant 0 : index
    %c0_48 = arith.constant 0 : index
    %c0_49 = arith.constant 0 : index
    %c10 = arith.constant 10 : index
    %24 = vector.load %arg1[%c0_46, %c0_47, %c0_48, %c0_49, %c10] : memref<1x2x2x4x90xf32, #tpu.memory_space<vmem>>, vector<1x1x1x4x72xf32>
    %25 = vector.shape_cast %24 : vector<1x1x1x4x72xf32> to vector<4x72xf32>
    %c32 = arith.constant 32 : index
    %c0_50 = arith.constant 0 : index
    %26 = vector.load %arg5[%c32, %c0_50] : memref<36x72xf32, #tpu.memory_space<vmem>>, vector<4x72xf32>
    tpu.vector_store %arg5[%c32, %c0_50], %25 {strides = array<i32>} : memref<36x72xf32, #tpu.memory_space<vmem>>, vector<4x72xf32>,
    %c0_51 = arith.constant 0 : index
    %c0_52 = arith.constant 0 : index
    %27 = vector.load %arg5[%c0_51, %c0_52] : memref<36x72xf32, #tpu.memory_space<vmem>>, vector<36x72xf32>
    %c0_53 = arith.constant 0 : index
    %c0_54 = arith.constant 0 : index
    %28 = vector.load %arg2[%c0_53, %c0_54] : memref<8x36xf32, #tpu.memory_space<vmem>>, vector<8x36xf32>
    %cst = arith.constant dense<0.000000e+00> : vector<8x72xf32>
    %29 = tpu.matmul %28, %27, %cst {dimension_numbers = #tpu.dot_dimension_numbers<[1], [0], [0], [1], [0, 0, 1, 1], [], []>} : vector<8x36xf32>, vector<36x72xf32>, vector<8x72xf32> -> vector<8x72xf32>
    %c0_55 = arith.constant 0 : index
    %c0_56 = arith.constant 0 : index
    %30 = vector.load %arg3[%c0_55, %c0_56] : memref<8x1xf32, #tpu.memory_space<vmem>>, vector<8x1xf32>
    %31 = vector.broadcast %30 : vector<8x1xf32> to vector<8x72xf32>
    %32 = arith.addf %29, %31 : vector<8x72xf32>
    %33 = arith.negf %32 : vector<8x72xf32>
    %34 = math.exp %33 : vector<8x72xf32>
    %cst_57 = arith.constant 1.000000e+00 : f32
    %35 = vector.broadcast %cst_57 : f32 to vector<8x72xf32>
    %36 = arith.addf %35, %34 : vector<8x72xf32>
    %37 = arith.divf %35, %36 : vector<8x72xf32>
    %38 = arith.mulf %32, %37 : vector<8x72xf32>
    %c0_58 = arith.constant 0 : index
    %c0_59 = arith.constant 0 : index
    %c0_60 = arith.constant 0 : index
    %39 = vector.load %arg4[%c0_58, %c0_59, %c0_60] : memref<1x8x72xf32, #tpu.memory_space<vmem>>, vector<1x8x72xf32>
    %40 = vector.shape_cast %39 : vector<1x8x72xf32> to vector<8x72xf32>
    %41 = vector.shape_cast %38 : vector<8x72xf32> to vector<1x8x72xf32>
    tpu.vector_store %arg4[%c0_58, %c0_59, %c0_60], %41 {strides = array<i32>} : memref<1x8x72xf32, #tpu.memory_space<vmem>>, vector<1x8x72xf32>,
    return
  }
  func.func @transform_0(%arg0: i32) -> (i32, i32, i32, i32, i32) {
    %c0_i32 = arith.constant 0 : i32
    %c0_i32_0 = arith.constant 0 : i32
    %c0_i32_1 = arith.constant 0 : i32
    %c0_i32_2 = arith.constant 0 : i32
    %c0_i32_3 = arith.constant 0 : i32
    return %arg0, %c0_i32, %c0_i32_0, %c0_i32_1, %c0_i32_2 : i32, i32, i32, i32, i32
  }
  func.func @transform_1(%arg0: i32) -> (i32, i32) {
    %c0_i32 = arith.constant 0 : i32
    %c0_i32_0 = arith.constant 0 : i32
    %c0_i32_1 = arith.constant 0 : i32
    return %c0_i32, %c0_i32_0 : i32, i32
  }
  func.func @transform_2(%arg0: i32) -> (i32, i32) {
    %c0_i32 = arith.constant 0 : i32
    %c0_i32_0 = arith.constant 0 : i32
    %c0_i32_1 = arith.constant 0 : i32
    return %c0_i32, %c0_i32_0 : i32, i32
  }
  func.func @transform_3(%arg0: i32) -> (i32, i32, i32) {
    %c0_i32 = arith.constant 0 : i32
    %c0_i32_0 = arith.constant 0 : i32
    %c0_i32_1 = arith.constant 0 : i32
    return %arg0, %c0_i32, %c0_i32_0 : i32, i32, i32
  }
}

</mosaic_0001>

<llo_original>
// kernel: conv_kxbn_relu.1
$region0: #{conv_kxbn_relu.1}
  #allocation0 [shape = 'u32[]', space=smem, size = 0x4, offset = 0x4, fixed_abs, tag = 'smem constant byte address 0x4 - core index']
  #allocation1 [shape = 'u32[144,128]{1,0:T(1,128)}', space=vmem, size = 0x12000, scoped, tag = 'internal scratch']
  #allocation2 [shape = 'f32[36,72]{1,0:T(8,128)}', space=vmem, size = 0x5000, scoped, tag = 'scratch operand']
  %s0 = inlined_call_operand.vmem [shape: f32[2,2,2,4,90], index: 0, kind: input, shape index: {}]
  %s1 = inlined_call_operand.vmem [shape: f32[8,36], index: 1, kind: input, shape index: {}]
  %s2 = inlined_call_operand.vmem [shape: f32[8,1], index: 2, kind: input, shape index: {}]
  %s3 = inlined_call_operand.vmem [shape: f32[2,8,72], index: 3, kind: output, shape index: {}]
  %s4 = sld [smem:[#allocation0]]
  $region45: #{conv_kxbn_relu.1} parent=0
    _
  %s6 = ssub.s32 1, %s4
  %s7 = scalar_select 0, %s6, %s4
  loop: start=0, step=1, limit=4
  $region2: #{conv_kxbn_relu.1} parent=0 // loop_pre_header
    _
  $region3: #{conv_kxbn_relu.1} parent=0 // loop_header
    %s9 = sphi 0, %s13
    %p10 = scmp.ge.s32.totalorder %s9, 4
    %s19 = sphi 0, %s21
    %s22 = sphi 0, %s19
    %s23 = sphi 0, %s22
    %s39 = sphi 0, %s23
    %s43 = sphi 0, %s43
    %s45 = sphi 0, %s43
    %s46 = sphi 0, %s45
    %s60 = sphi 0, %s46
    %s64 = sphi 0, %s64
    %s66 = sphi 0, %s64
    %s67 = sphi 0, %s66
    %s81 = sphi 0, %s67
    %s87 = sphi 0, %s89
    %s90 = sphi 0, %s87
    %s91 = sphi 0, %s90
    %s107 = sphi 0, %s91
  $region4: #{conv_kxbn_relu.1} parent=0 // loop_header_branch
    %12 = sbr.rel (%p10) target = $region8
  $region5: #{conv_kxbn_relu.1} parent=0 // loop_body
    %s14 = ssub.s32 %s9, 1
    %s15 = ssub.s32 %s9, 2
    %s16 = sadd.s32 %s9, 1
    %s17 = ssub.s32 %s9, %s16
    %p18 = scmp.eq.s32.totalorder %s17, 0
    %s20 = sadd.s32 %s19, 1
    %s21 = scalar_select %p18, %s19, %s20
    %p24 = pneg %p18
    %p25 = scmp.eq.s32.totalorder %s9, 1
    %p26 = por %p24, %p25
    %p27 = scmp.ne.s32.totalorder %s19, %s22
    %p28 = scmp.eq.s32.totalorder %s9, 0
    %p29 = por %p27, %p28
    %p30 = scmp.ne.s32.totalorder %s19, %s22
    %p31 = scmp.eq.s32.totalorder %s14, 1
    %p32 = por %p30, %p31
    %p33 = scmp.ne.s32.totalorder %s22, %s23
    %p34 = scmp.eq.s32.totalorder %s14, 0
    %p35 = por %p33, %p34
    %p36 = scmp.ne.s32.totalorder %s22, %s23
    %p37 = scmp.eq.s32.totalorder %s15, 1
    %p38 = por %p36, %p37
    %p40 = scmp.ne.s32.totalorder %s23, %s39
    %p41 = scmp.eq.s32.totalorder %s15, 0
    %p42 = por %p40, %p41
    %s44 = sadd.s32 %s43, 1
    %p47 = scmp.eq.s32.totalorder %s9, 1
    %p48 = scmp.ne.s32.totalorder %s43, %s45
    %p49 = scmp.eq.s32.totalorder %s9, 0
    %p50 = por %p48, %p49
    %p51 = scmp.ne.s32.totalorder %s43, %s45
    %p52 = scmp.eq.s32.totalorder %s14, 1
    %p53 = por %p51, %p52
    %p54 = scmp.ne.s32.totalorder %s45, %s46
    %p55 = scmp.eq.s32.totalorder %s14, 0
    %p56 = por %p54, %p55
    %p57 = scmp.ne.s32.totalorder %s45, %s46
    %p58 = scmp.eq.s32.totalorder %s15, 1
    %p59 = por %p57, %p58
    %p61 = scmp.ne.s32.totalorder %s46, %s60
    %p62 = scmp.eq.s32.totalorder %s15, 0
    %p63 = por %p61, %p62
    %s65 = sadd.s32 %s64, 1
    %p68 = scmp.eq.s32.totalorder %s9, 1
    %p69 = scmp.ne.s32.totalorder %s64, %s66
    %p70 = scmp.eq.s32.totalorder %s9, 0
    %p71 = por %p69, %p70
    %p72 = scmp.ne.s32.totalorder %s64, %s66
    %p73 = scmp.eq.s32.totalorder %s14, 1
    %p74 = por %p72, %p73
    %p75 = scmp.ne.s32.totalorder %s66, %s67
    %p76 = scmp.eq.s32.totalorder %s14, 0
    %p77 = por %p75, %p76
    %p78 = scmp.ne.s32.totalorder %s66, %s67
    %p79 = scmp.eq.s32.totalorder %s15, 1
    %p80 = por %p78, %p79
    %p82 = scmp.ne.s32.totalorder %s67, %s81
    %p83 = scmp.eq.s32.totalorder %s15, 0
    %p84 = por %p82, %p83
    %s85 = ssub.s32 %s9, %s16
    %p86 = scmp.eq.s32.totalorder %s85, 0
    %s88 = sadd.s32 %s87, 1
    %s89 = scalar_select %p86, %s87, %s88
    %p92 = pneg %p86
    %p93 = scmp.eq.s32.totalorder %s9, 1
    %p94 = por %p92, %p93
    %p95 = scmp.ne.s32.totalorder %s87, %s90
    %p96 = scmp.eq.s32.totalorder %s9, 0
    %p97 = por %p95, %p96
    %p98 = scmp.ne.s32.totalorder %s87, %s90
    %p99 = scmp.eq.s32.totalorder %s14, 1
    %p100 = por %p98, %p99
    %p101 = scmp.ne.s32.totalorder %s90, %s91
    %p102 = scmp.eq.s32.totalorder %s14, 0
    %p103 = por %p101, %p102
    %p104 = scmp.ne.s32.totalorder %s90, %s91
    %p105 = scmp.eq.s32.totalorder %s15, 1
    %p106 = por %p104, %p105
    %p108 = scmp.ne.s32.totalorder %s91, %s107
    %p109 = scmp.eq.s32.totalorder %s15, 0
    %p110 = por %p108, %p109
    %p111 = scmp.le.s32.totalorder 1, %s9
    %p112 = scmp.lt.s32.totalorder %s9, 3
    %p113 = pnand %p111, %p112
    %p114 = pneg %p113
    // Predicated region
    $region9: #{conv_kxbn_relu.1} parent=5 // pred_check
      _
    $region10: #{conv_kxbn_relu.1} parent=5 // pred_check_branch
      %116 = sbr.rel (%p113) target = $region12
    $region11: #{conv_kxbn_relu.1} parent=5 // pred_region
      %s117 = ssub.s32 %s9, 1
      // Predicated region
      $region13: #{conv_kxbn_relu.1} parent=11 // pred_check
        %p118 = pneg %p56
      $region14: #{conv_kxbn_relu.1} parent=11 // pred_check_branch
        %120 = sbr.rel (%p118) target = $region16
      $region15: #{conv_kxbn_relu.1} parent=11 // pred_region
        _
      $region16: #{conv_kxbn_relu.1} parent=11 // pred_fallthru
        _
      // Predicated region
      $region17: #{conv_kxbn_relu.1} parent=11 // pred_check
        %p121 = pneg %p77
      $region18: #{conv_kxbn_relu.1} parent=11 // pred_check_branch
        %123 = sbr.rel (%p121) target = $region20
      $region19: #{conv_kxbn_relu.1} parent=11 // pred_region
        _
      $region20: #{conv_kxbn_relu.1} parent=11 // pred_fallthru
        _
    $region12: #{conv_kxbn_relu.1} parent=5 // pred_fallthru
      _
    %p124 = scmp.lt.s32.totalorder %s9, 2
    // Predicated region
    $region21: #{conv_kxbn_relu.1} parent=5 // pred_check
      %p125 = pneg %p124
    $region22: #{conv_kxbn_relu.1} parent=5 // pred_check_branch
      %127 = sbr.rel (%p125) target = $region24
    $region23: #{conv_kxbn_relu.1} parent=5 // pred_region
      // Predicated region
      $region25: #{conv_kxbn_relu.1} parent=23 // pred_check
        %p128 = pneg %p29
      $region26: #{conv_kxbn_relu.1} parent=23 // pred_check_branch
        %130 = sbr.rel (%p128) target = $region28
      $region27: #{conv_kxbn_relu.1} parent=23 // pred_region
        %p131 = scmp.lt.s32.totalorder %s9, 1
        %s132 = scalar_select %p131, %s9, 1
        %s133 = smul.addr %s132, 4
        %s134 = smul.addr %s133, 4
        %s135 = scalar_lea.vmem %s0, %s134
      $region28: #{conv_kxbn_relu.1} parent=23 // pred_fallthru
        _
    $region24: #{conv_kxbn_relu.1} parent=5 // pred_fallthru
      _
    %p136 = scmp.le.s32.totalorder 1, %s9
    %p137 = scmp.lt.s32.totalorder %s9, 3
    %p138 = pnand %p136, %p137
    %p139 = pneg %p138
    // Predicated region
    $region29: #{conv_kxbn_relu.1} parent=5 // pred_check
      _
    $region30: #{conv_kxbn_relu.1} parent=5 // pred_check_branch
      %141 = sbr.rel (%p138) target = $region32
    $region31: #{conv_kxbn_relu.1} parent=5 // pred_region
      %s142 = ssub.s32 %s9, 1
      %p143 = scmp.lt.s32.totalorder %s14, 1
      %s144 = scalar_select %p143, %s14, 1
      %s145 = smul.addr %s144, 4
      %s146 = smul.addr %s145, 4
      %s147 = scalar_lea.vmem %s0, %s146
      %p148 = pneg %p35
      %p149 = pneg %p32
      %p150 = pneg %p56
      %p151 = pneg %p53
      %p152 = pneg %p77
      %p153 = pneg %p74
      %p154 = pneg %p103
      %p155 = pneg %p100
      %p156 = scmp.lt.s32.totalorder %s14, 1
      %s157 = scalar_select %p156, %s14, 1
      %s158 = smul.addr %s157, 8
      %s159 = scalar_lea.vmem %s3, %s158
      %p160 = scmp.lt.s32.totalorder %s14, 1
      %s161 = scalar_select %p160, %s14, 1
      %s162 = smul.addr %s161, 4
      %s163 = smul.addr %s162, 4
      %s164 = scalar_lea.vmem %s0, %s163
      %p165 = scmp.lt.s32.totalorder %s14, 1
      %s166 = scalar_select %p165, %s14, 1
      %s167 = smul.addr %s166, 8
      %s168 = scalar_lea.vmem %s3, %s167
      %v169 = vld [vmem:[%s164] sm:$0xf]
      %vm170 = vcmask 584704
      %171 = vst.msk [vmem:[#allocation2] sm:$0xf] %vm170, %v169
      %s172 = scalar_lea.vmem %s164, 4
      %v173 = vld [vmem:[%s172] sm:$0xf]
      %174 = vst.msk [vmem:[#allocation2 + $0x4] sm:$0xf] %vm170, %v173
      %v175 = vld [vmem:[%s164] sm:$0xf]
      %177 = vrot.lane.b32.xlu0 %v175, 127
      %v178 = vpop.permute.xlu0 %177
      %180 = vst.msk [vmem:[#allocation2 + $0x8] sm:$0xf] %vm170, %v178
      %s181 = scalar_lea.vmem %s164, 8
      %v182 = vld [vmem:[%s181] sm:$0xf]
      %183 = vst.msk [vmem:[#allocation2 + $0xc] sm:$0xf] %vm170, %v182
      %s184 = scalar_lea.vmem %s164, 12
      %v185 = vld [vmem:[%s184] sm:$0xf]
      %186 = vst.msk [vmem:[#allocation2 + $0x10] sm:$0xf] %vm170, %v185
      %v187 = vld [vmem:[%s181] sm:$0xf]
      %189 = vrot.lane.b32.xlu0 %v187, 127
      %v190 = vpop.permute.xlu0 %189
      %192 = vst.msk [vmem:[#allocation2 + $0x14] sm:$0xf] %vm170, %v190
      %v193 = vld [vmem:[%s164] sm:$0xf]
      %195 = vrot.lane.b32.xlu0 %v193, 119
      %v196 = vpop.permute.xlu0 %195
      %198 = vst.msk [vmem:[#allocation2 + $0x18] sm:$0xf] %vm170, %v196
      %v199 = vld [vmem:[%s172] sm:$0xf]
      %201 = vrot.lane.b32.xlu0 %v199, 119
      %v202 = vpop.permute.xlu0 %201
      %204 = vst.msk [vmem:[#allocation2 + $0x1c] sm:$0xf] %vm170, %v202
      %v205 = vld [vmem:[%s164] sm:$0xf]
      %207 = vrot.lane.b32.xlu0 %v205, 118
      %v208 = vpop.permute.xlu0 %207
      %210 = vst.msk [vmem:[#allocation2 + $0x20] sm:$0xf] %vm170, %v208
      %v211 = vld [vmem:[#allocation2] sm:$0xff]
      %v212 = vld [vmem:[#allocation2 + $0x8] sm:$0xff]
      %v213 = vld [vmem:[#allocation2 + $0x10] sm:$0xff]
      %v214 = vld [vmem:[#allocation2 + $0x18] sm:$0xff]
      %v215 = vld [vmem:[#allocation2 + $0x20] sm:$0xf]
      %v216 = vld [vmem:[%s1] sm:$0xff]
      %v217 = vld [vmem:[%s2] sm:$0xff]
      %219 = vset.pattern.permute.xlu0 0
      %220 = vperm.xlu0 %219, %v217
      %v221 = vpop.permute.xlu0 %220
      %vm223 = vcmask 293888
      %v225 = vsel %vm223, %v216, 0
      %vm227 = vcmask 1043456
      %v229 = vsel %vm227, %v215, 0
      %231 = vmatprep.subr.mxu0 0.0
      %232 = vmatpush1.msra.mxu0 %v211
      %233 = vmatprep.subr.mxu0 0.0
      %234 = vmatpush1.msra.mxu0 %v212
      %235 = vmatprep.subr.mxu0 0.0
      %236 = vmatpush1.msra.mxu0 %v213
      %237 = vmatprep.subr.mxu0 0.0
      %238 = vmatpush1.msra.mxu0 %v214
      %239 = vmatprep.subr.mxu0 0.0
      %240 = vmatpush1.msra.mxu0 %v229
      %241 = vmatprep.subr.mxu0 0.0
      %242 = vmatpush1.msra.mxu0 0.0
      %243 = vmatprep.subr.mxu0 0.0
      %244 = vmatpush1.msra.mxu0 0.0
      %245 = vmatprep.subr.mxu0 0.0
      %246 = vmatpush1.msra.mxu0 0.0
      %247 = vmatprep.subr.mxu0 0.0
      %248 = vmatpush1.msra.mxu0 0.0
      %249 = vmatprep.subr.mxu0 0.0
      %250 = vmatpush1.msra.mxu0 0.0
      %251 = vmatprep.subr.mxu0 0.0
      %252 = vmatpush1.msra.mxu0 0.0
      %253 = vmatprep.subr.mxu0 0.0
      %254 = vmatpush1.msra.mxu0 0.0
      %255 = vmatprep.subr.mxu0 0.0
      %256 = vmatpush1.msra.mxu0 0.0
      %257 = vmatprep.subr.mxu0 0.0
      %258 = vmatpush1.msra.mxu0 0.0
      %259 = vmatprep.subr.mxu0 0.0
      %260 = vmatpush1.msra.mxu0 0.0
      %261 = vmatprep.subr.mxu0 0.0
      %262 = vmatpush1.msra.mxu0 0.0
      %263 = vmatprep.subr.mxu0 0.0
      %264 = vmatpush1.msra.mxu0 0.0
      %265 = vmatprep.subr.mxu0 0.0
      %266 = vmatpush1.msra.mxu0 0.0
      %267 = vmatprep.subr.mxu0 0.0
      %268 = vmatpush1.msra.mxu0 0.0
      %269 = vmatprep.subr.mxu0 0.0
      %270 = vmatpush1.msra.mxu0 0.0
      %271 = vmatprep.subr.mxu0 0.0
      %272 = vmatpush1.msra.mxu0 0.0
      %273 = vmatprep.subr.mxu0 0.0
      %274 = vmatpush1.msra.mxu0 0.0
      %275 = vmatprep.subr.mxu0 0.0
      %276 = vmatpush1.msra.mxu0 0.0
      %277 = vmatprep.subr.mxu0 0.0
      %278 = vmatpush1.msra.mxu0 0.0
      %279 = vmatprep.subr.mxu0 0.0
      %280 = vmatpush1.msra.mxu0 0.0
      %281 = vmatprep.subr.mxu0 0.0
      %282 = vmatpush1.msra.mxu0 0.0
      %283 = vmatprep.subr.mxu0 0.0
      %284 = vmatpush1.msra.mxu0 0.0
      %285 = vmatprep.subr.mxu0 0.0
      %286 = vmatpush1.msra.mxu0 0.0
      %287 = vmatprep.subr.mxu0 0.0
      %288 = vmatpush1.msra.mxu0 0.0
      %289 = vmatprep.subr.mxu0 0.0
      %290 = vmatpush1.msra.mxu0 0.0
      %291 = vmatprep.subr.mxu0 0.0
      %292 = vmatpush1.msra.mxu0 0.0
      %293 = vmatprep.subr.mxu0 0.0
      %294 = vmatpush1.msra.mxu0 0.0
      %295 = vmatprep.mubr.f32.mxu0 0.0
      %296 = vmatmul.mubr.f32.gmra.mrb[0].mxu0 %v225
      %v297 = vpop.f32.mrb[0].mxu0
      %v298 = vadd.f32 %v221, %v297
      %v299 = vpop.f32.mrb[0].mxu0
      %300 = vdwg.mxu0
      %v301 = vxor.u32 %v298, 2147483648
      %v302 = vmul.f32 %v301, 1.442695
      %v303 = vpow.pop %v302
      %v304 = vadd.f32 %v303, 1.0
      %v305 = vrcp.pop %v304
      %v306 = vmul.f32 1.0, %v305
      %v307 = vmul.f32 %v298, %v306
      %vm308 = vcmask 588800
      %309 = vst.msk [vmem:[%s168] sm:$0xff] %vm308, %v307
      %p310 = scmp.lt.s32.totalorder %s14, 1
      %s311 = scalar_select %p310, %s14, 1
      %s312 = smul.addr %s311, 8
      %s313 = scalar_lea.vmem %s3, %s312
      // Predicated region
      $region33: #{conv_kxbn_relu.1} parent=31 // pred_check
        %p314 = pneg %p100
      $region34: #{conv_kxbn_relu.1} parent=31 // pred_check_branch
        %316 = sbr.rel (%p314) target = $region36
      $region35: #{conv_kxbn_relu.1} parent=31 // pred_region
        _
      $region36: #{conv_kxbn_relu.1} parent=31 // pred_fallthru
        _
    $region32: #{conv_kxbn_relu.1} parent=5 // pred_fallthru
      _
    %p317 = scmp.le.s32.totalorder 2, %s9
    // Predicated region
    $region37: #{conv_kxbn_relu.1} parent=5 // pred_check
      %p318 = pneg %p317
    $region38: #{conv_kxbn_relu.1} parent=5 // pred_check_branch
      %320 = sbr.rel (%p318) target = $region40
    $region39: #{conv_kxbn_relu.1} parent=5 // pred_region
      %s321 = ssub.s32 %s9, 2
      // Predicated region
      $region41: #{conv_kxbn_relu.1} parent=39 // pred_check
        %p322 = pneg %p106
      $region42: #{conv_kxbn_relu.1} parent=39 // pred_check_branch
        %324 = sbr.rel (%p322) target = $region44
      $region43: #{conv_kxbn_relu.1} parent=39 // pred_region
        %p325 = scmp.lt.s32.totalorder %s15, 1
        %s326 = scalar_select %p325, %s15, 1
        %s327 = smul.addr %s326, 8
        %s328 = scalar_lea.vmem %s3, %s327
      $region44: #{conv_kxbn_relu.1} parent=39 // pred_fallthru
        _
    $region40: #{conv_kxbn_relu.1} parent=5 // pred_fallthru
      _
  $region6: #{conv_kxbn_relu.1} parent=0 // loop_footer
    %s13 = sadd.s32 1, %s9
  $region7: #{conv_kxbn_relu.1} parent=0 // loop_footer_branch
    %8 = sbr.rel target = $region3
  $region8: #{conv_kxbn_relu.1} parent=0 // loop_exit
    _

</llo_original>
